<compile_context>
chip_gen: v7x
topology: tpu7x:2x2x1
jax: 0.10.0
libtpu: 0.0.40
codegen_flags: <defaults>
</compile_context>

<pallas_src>
import functools

import jax
import jax.numpy as jnp
from jax import lax
from jax.experimental import pallas as pl
from jax.experimental.pallas import tpu as pltpu

LANE = 128


def _round_up(x, m):
    return (x + m - 1) // m * m


# ---------------------------------------------------------------------------
# Kernel
# ---------------------------------------------------------------------------
def residual_block_kernel(x_ref, wcat_ref, bcat_ref, w2_ref, b2_ref,
                          gamma_ref, beta_ref, o_ref,
                          *, hidden_pad, out_dim, eps, use_layer_norm):
    mm_dtype = wcat_ref.dtype        # weights are pre-cast; only activations cast
    x = x_ref[...].astype(mm_dtype)

    # Fused first matmul: x @ [W1 | Wskip]  -> one MXU pass instead of two.
    hz = jnp.dot(x, wcat_ref[...],
                 preferred_element_type=jnp.float32) + bcat_ref[...]

    h = jnp.maximum(hz[:, :hidden_pad], 0.0)   # ReLU (f32); padded cols stay 0
    skip = hz[:, hidden_pad:]                  # skip branch; padded cols are 0

    dense = jnp.dot(h.astype(mm_dtype), w2_ref[...],
                    preferred_element_type=jnp.float32) + b2_ref[...]

    # Dropout is identity at inference.
    y = dense + skip                           # padded output columns are 0

    if use_layer_norm:
        # Mask-free LayerNorm over the true out_dim columns using
        # var = E[y^2] - mean^2. Padded columns are exactly zero before LN, so
        # both sums equal the true sums; padded output columns become nonzero
        # afterwards but are stripped by the wrapper slice.
        inv_n = 1.0 / out_dim
        mean = jnp.sum(y, axis=-1, keepdims=True) * inv_n
        mean_sq = jnp.sum(y * y, axis=-1, keepdims=True) * inv_n
        var = mean_sq - mean * mean
        y = (y - mean) * lax.rsqrt(var + eps) * gamma_ref[...] + beta_ref[...]

    o_ref[...] = y.astype(o_ref.dtype)


# ---------------------------------------------------------------------------
# Parameter preparation (one-time): pad all feature dims to 128, fuse W1|Wskip,
# and store the weight matrices directly in the matmul dtype (bf16 by default).
# ---------------------------------------------------------------------------
def prepare_params(params, *, matmul_dtype=jnp.bfloat16):
    w1, b1 = params["w1"], params["b1"]
    w2, b2 = params["w2"], params["b2"]
    ws, bs = params["ws"], params["bs"]
    in_dim, hidden = w1.shape
    out_dim = w2.shape[1]
    ip = _round_up(in_dim, LANE)
    hp = _round_up(hidden, LANE)
    op = _round_up(out_dim, LANE)

    w1p = jnp.zeros((ip, hp), jnp.float32).at[:in_dim, :hidden].set(w1)
    wsp = jnp.zeros((ip, op), jnp.float32).at[:in_dim, :out_dim].set(ws)
    w_cat = jnp.concatenate([w1p, wsp], axis=1).astype(matmul_dtype)  # (ip, hp+op)
    b_cat = jnp.concatenate([
        jnp.zeros((hp,), jnp.float32).at[:hidden].set(b1),
        jnp.zeros((op,), jnp.float32).at[:out_dim].set(bs),
    ]).reshape(1, -1)                                                 # (1, hp+op) f32

    w2p = (jnp.zeros((hp, op), jnp.float32).at[:hidden, :out_dim].set(w2)
           .astype(matmul_dtype))
    b2p = jnp.zeros((1, op), jnp.float32).at[0, :out_dim].set(b2)

    gamma = params.get("gamma", jnp.ones((out_dim,), jnp.float32))
    beta = params.get("beta", jnp.zeros((out_dim,), jnp.float32))
    gp = jnp.ones((1, op), jnp.float32).at[0, :out_dim].set(gamma)
    bp = jnp.zeros((1, op), jnp.float32).at[0, :out_dim].set(beta)

    return dict(w_cat=w_cat, b_cat=b_cat, w2=w2p, b2=b2p, gamma=gp, beta=bp,
                in_pad=ip, hidden_pad=hp, out_pad=op,
                in_dim=in_dim, out_dim=out_dim)


# ---------------------------------------------------------------------------
# BlockSpec helpers
# ---------------------------------------------------------------------------
def _resident_spec(shape):
    """Grid-invariant operand: constant index_map, single-buffered."""
    idx = lambda i: (0, 0)
    try:
        return pl.BlockSpec(shape, idx, pipeline_mode=pl.Buffered(1))
    except TypeError:  # older API without pipeline_mode: fall back gracefully
        return pl.BlockSpec(shape, idx)


def _vmem_limit_bytes(prep, tm, x_itemsize, out_itemsize):
    weight_names = ("w_cat", "b_cat", "w2", "b2", "gamma", "beta")
    weight_bytes = sum(int(prep[k].size) * prep[k].dtype.itemsize
                       for k in weight_names)
    tile_bytes = tm * prep["in_pad"] * x_itemsize + tm * prep["out_pad"] * out_itemsize
    # 2x weights in case the Buffered(1) fallback double-buffers them,
    # 2x tiles for double-buffered x/out, + compiler scratch headroom.
    needed = 2 * weight_bytes + 2 * tile_bytes + (4 << 20)
    # Floor 32 MiB (>= every chip's scoped default), cap 64 MiB (v7x physical).
    return int(min(64 << 20, max(needed, 32 << 20)))


# ---------------------------------------------------------------------------
# Wrapper
# ---------------------------------------------------------------------------
def residual_block(x, prep, *, use_layer_norm=True, tile_m=1024, eps=1e-5,
                   trim_output=True):
    """x: (B, input_dim).  prep: output of prepare_params().

    tile_m=1024 is a good default for v5e/v6e (128 MiB VMEM, weights resident
    & single-buffered); on v7x (64 MiB) the vmem_limit sizing still fits for
    TiDE-scale dims.  Set trim_output=False to keep the lane-padded (B, op)
    output and skip the post-kernel slice (extra HBM read+write) when the
    consumer can handle padding.
    """
    B, in_dim = x.shape
    assert in_dim == prep["in_dim"]
    ip, hp, op, out_dim = (prep["in_pad"], prep["hidden_pad"],
                           prep["out_pad"], prep["out_dim"])

    # Lane-pad x so the contraction dim is 128-aligned and x loads are dense.
    if ip != in_dim:
        x = jnp.pad(x, ((0, 0), (0, ip - in_dim)))

    # Batch tile: multiple of 8 (sublane).  Ensure >= 2 grid steps whenever
    # possible so the "parallel" axis shards across both v7x TensorCores.
    if B <= 8:
        tm = B
    else:
        tm = min(tile_m, B)
        if tm >= B:
            tm = _round_up(pl.cdiv(B, 2), 8)
        else:
            tm = max(8, (tm // 8) * 8)
    grid = (pl.cdiv(B, tm),)

    kernel = functools.partial(
        residual_block_kernel,
        hidden_pad=hp, out_dim=out_dim, eps=eps, use_layer_norm=use_layer_norm)

    vmem_limit = _vmem_limit_bytes(prep, tm, x.dtype.itemsize, x.dtype.itemsize)

    out_padded = pl.pallas_call(
        kernel,
        out_shape=jax.ShapeDtypeStruct((B, op), x.dtype),
        grid=grid,
        in_specs=[
            # x: tiled along batch (double-buffered by default).
            pl.BlockSpec((tm, ip), lambda i: (i, 0)),
            # weights / biases / LN params: VMEM-resident, single-buffered.
            _resident_spec(prep["w_cat"].shape),
            _resident_spec(prep["b_cat"].shape),
            _resident_spec(prep["w2"].shape),
            _resident_spec(prep["b2"].shape),
            _resident_spec(prep["gamma"].shape),
            _resident_spec(prep["beta"].shape),
        ],
        out_specs=pl.BlockSpec((tm, op), lambda i: (i, 0)),
        compiler_params=pltpu.CompilerParams(
            dimension_semantics=("parallel",),
            vmem_limit_bytes=vmem_limit),
    )(x, prep["w_cat"], prep["b_cat"], prep["w2"], prep["b2"],
      prep["gamma"], prep["beta"])

    if not trim_output:
        return out_padded
    # Strip the lane padding (cheap XLA slice outside the kernel).
    return out_padded[:, :out_dim]


# ---------------------------------------------------------------------------
# Reference + init
# ---------------------------------------------------------------------------
def init_params(key, input_dim, output_dim, hidden_size):
    ks = jax.random.split(key, 3)

    def lin(k, fan_in, fan_out):
        bound = 1.0 / (fan_in ** 0.5)
        kw, kb = jax.random.split(k)
        w = jax.random.uniform(kw, (fan_in, fan_out), jnp.float32, -bound, bound)
        b = jax.random.uniform(kb, (fan_out,), jnp.float32, -bound, bound)
        return w, b

    w1, b1 = lin(ks[0], input_dim, hidden_size)
    w2, b2 = lin(ks[1], hidden_size, output_dim)
    ws, bs = lin(ks[2], input_dim, output_dim)
    gamma = jnp.ones((output_dim,), jnp.float32)
    beta = jnp.zeros((output_dim,), jnp.float32)
    return dict(w1=w1, b1=b1, w2=w2, b2=b2, ws=ws, bs=bs, gamma=gamma, beta=beta)


def residual_block_ref(x, p, use_layer_norm=True):
    h = jnp.maximum(x @ p["w1"] + p["b1"], 0.0)
    dense = h @ p["w2"] + p["b2"]
    skip = x @ p["ws"] + p["bs"]
    y = dense + skip
    if not use_layer_norm:
        return y
    mean = jnp.mean(y, axis=-1, keepdims=True)
    var = jnp.mean((y - mean) ** 2, axis=-1, keepdims=True)
    return (y - mean) / jnp.sqrt(var + 1e-5) * p["gamma"] + p["beta"]


if __name__ == "__main__":
    key = jax.random.PRNGKey(0)
    k_x, k_p = jax.random.split(key)

    batch, input_dim, output_dim, hidden_size = 16, 32, 16, 64
    x = jax.random.normal(k_x, (batch, input_dim), jnp.float32)
    raw = init_params(k_p, input_dim, output_dim, hidden_size)
    ref = residual_block_ref(x, raw)

    # f32-operand path: matches the PyTorch module numerics exactly.
    prep_f32 = prepare_params(raw, matmul_dtype=jnp.float32)
    out = jax.block_until_ready(residual_block(x, prep_f32))
    assert out.shape == (batch, output_dim)
    assert jnp.allclose(out, ref, atol=1e-4, rtol=1e-4), "f32 mismatch vs reference"

    # bf16-weight path (default): MXU fast path on v6e/v7x, f32 accumulate + LN.
    prep_bf16 = prepare_params(raw)
    out_bf16 = jax.block_until_ready(residual_block(x, prep_bf16))
    assert jnp.allclose(out_bf16, ref, atol=1e-1, rtol=1e-1), "bf16 path mismatch"

    # use_layer_norm=False variant (separate compiled kernel, no identity-LN hack).
    out_noln = jax.block_until_ready(
        residual_block(x, prep_f32, use_layer_norm=False))
    ref_noln = residual_block_ref(x, raw, use_layer_norm=False)
    assert jnp.allclose(out_noln, ref_noln, atol=1e-4, rtol=1e-4), "no-LN mismatch"

    print("KERNEL_OK")
</pallas_src>

<mosaic_0001>
module attributes {stable_mosaic.version = 11 : i64} {
  func.func @residual_block_kernel(%arg0: i32, %arg1: memref<8x128xf32, #tpu.memory_space<vmem>>, %arg2: memref<128x256xf32, #tpu.memory_space<vmem>>, %arg3: memref<1x256xf32, #tpu.memory_space<vmem>>, %arg4: memref<128x128xf32, #tpu.memory_space<vmem>>, %arg5: memref<1x128xf32, #tpu.memory_space<vmem>>, %arg6: memref<1x128xf32, #tpu.memory_space<vmem>>, %arg7: memref<1x128xf32, #tpu.memory_space<vmem>>, %arg8: memref<8x128xf32, #tpu.memory_space<vmem>>) attributes {dimension_semantics = [#tpu.dimension_semantics<parallel>], iteration_bounds = array<i64: 2>, scalar_prefetch = 0 : i64, scratch_operands = 0 : i64, tpu.core_type = #tpu.core_type<tc>, window_params = [{transform_indices = @transform_0, window_bounds = array<i64: 8, 128>}, {pipeline_mode = #tpu.pipeline_mode<synchronous>, transform_indices = @transform_1, window_bounds = array<i64: 128, 256>}, {pipeline_mode = #tpu.pipeline_mode<synchronous>, transform_indices = @transform_2, window_bounds = array<i64: 1, 256>}, {pipeline_mode = #tpu.pipeline_mode<synchronous>, transform_indices = @transform_3, window_bounds = array<i64: 128, 128>}, {pipeline_mode = #tpu.pipeline_mode<synchronous>, transform_indices = @transform_4, window_bounds = array<i64: 1, 128>}, {pipeline_mode = #tpu.pipeline_mode<synchronous>, transform_indices = @transform_5, window_bounds = array<i64: 1, 128>}, {pipeline_mode = #tpu.pipeline_mode<synchronous>, transform_indices = @transform_6, window_bounds = array<i64: 1, 128>}, {transform_indices = @transform_7, window_bounds = array<i64: 8, 128>}]} {
    %c0 = arith.constant 0 : index
    %c0_0 = arith.constant 0 : index
    %0 = vector.load %arg1[%c0, %c0_0] : memref<8x128xf32, #tpu.memory_space<vmem>>, vector<8x128xf32>
    %c0_1 = arith.constant 0 : index
    %c0_2 = arith.constant 0 : index
    %1 = vector.load %arg2[%c0_1, %c0_2] : memref<128x256xf32, #tpu.memory_space<vmem>>, vector<128x256xf32>
    %cst = arith.constant dense<0.000000e+00> : vector<8x256xf32>
    %2 = tpu.matmul %0, %1, %cst {dimension_numbers = #tpu.dot_dimension_numbers<[1], [0], [0], [1], [0, 0, 1, 1], [], []>} : vector<8x128xf32>, vector<128x256xf32>, vector<8x256xf32> -> vector<8x256xf32>
    %c0_3 = arith.constant 0 : index
    %c0_4 = arith.constant 0 : index
    %3 = vector.load %arg3[%c0_3, %c0_4] : memref<1x256xf32, #tpu.memory_space<vmem>>, vector<1x256xf32>
    %4 = vector.broadcast %3 : vector<1x256xf32> to vector<8x256xf32>
    %5 = arith.addf %2, %4 : vector<8x256xf32>
    %6 = vector.extract_strided_slice %5 {offsets = [0, 0], sizes = [8, 128], strides = [1, 1]} : vector<8x256xf32> to vector<8x128xf32>
    %cst_5 = arith.constant 0.000000e+00 : f32
    %7 = vector.broadcast %cst_5 : f32 to vector<8x128xf32>
    %8 = arith.maximumf %6, %7 : vector<8x128xf32>
    %9 = vector.extract_strided_slice %5 {offsets = [0, 128], sizes = [8, 128], strides = [1, 1]} : vector<8x256xf32> to vector<8x128xf32>
    %c0_6 = arith.constant 0 : index
    %c0_7 = arith.constant 0 : index
    %10 = vector.load %arg4[%c0_6, %c0_7] : memref<128x128xf32, #tpu.memory_space<vmem>>, vector<128x128xf32>
    %cst_8 = arith.constant dense<0.000000e+00> : vector<8x128xf32>
    %11 = tpu.matmul %8, %10, %cst_8 {dimension_numbers = #tpu.dot_dimension_numbers<[1], [0], [0], [1], [0, 0, 1, 1], [], []>} : vector<8x128xf32>, vector<128x128xf32>, vector<8x128xf32> -> vector<8x128xf32>
    %c0_9 = arith.constant 0 : index
    %c0_10 = arith.constant 0 : index
    %12 = vector.load %arg5[%c0_9, %c0_10] : memref<1x128xf32, #tpu.memory_space<vmem>>, vector<1x128xf32>
    %13 = vector.broadcast %12 : vector<1x128xf32> to vector<8x128xf32>
    %14 = arith.addf %11, %13 : vector<8x128xf32>
    %15 = arith.addf %14, %9 : vector<8x128xf32>
    %cst_11 = arith.constant dense<0.000000e+00> : vector<8xf32>
    %16 = vector.multi_reduction <add>, %15, %cst_11 [1] : vector<8x128xf32> to vector<8xf32>
    %17 = vector.shape_cast %16 : vector<8xf32> to vector<8x1xf32>
    %cst_12 = arith.constant 6.250000e-02 : f32
    %18 = vector.broadcast %cst_12 : f32 to vector<8x1xf32>
    %19 = arith.mulf %17, %18 : vector<8x1xf32>
    %20 = arith.mulf %15, %15 : vector<8x128xf32>
    %cst_13 = arith.constant dense<0.000000e+00> : vector<8xf32>
    %21 = vector.multi_reduction <add>, %20, %cst_13 [1] : vector<8x128xf32> to vector<8xf32>
    %22 = vector.shape_cast %21 : vector<8xf32> to vector<8x1xf32>
    %cst_14 = arith.constant 6.250000e-02 : f32
    %23 = vector.broadcast %cst_14 : f32 to vector<8x1xf32>
    %24 = arith.mulf %22, %23 : vector<8x1xf32>
    %25 = arith.mulf %19, %19 : vector<8x1xf32>
    %26 = arith.subf %24, %25 : vector<8x1xf32>
    %27 = vector.broadcast %19 : vector<8x1xf32> to vector<8x128xf32>
    %28 = arith.subf %15, %27 : vector<8x128xf32>
    %cst_15 = arith.constant 9.99999974E-6 : f32
    %29 = vector.broadcast %cst_15 : f32 to vector<8x1xf32>
    %30 = arith.addf %26, %29 : vector<8x1xf32>
    %31 = math.rsqrt %30 : vector<8x1xf32>
    %32 = vector.broadcast %31 : vector<8x1xf32> to vector<8x128xf32>
    %33 = arith.mulf %28, %32 : vector<8x128xf32>
    %c0_16 = arith.constant 0 : index
    %c0_17 = arith.constant 0 : index
    %34 = vector.load %arg6[%c0_16, %c0_17] : memref<1x128xf32, #tpu.memory_space<vmem>>, vector<1x128xf32>
    %35 = vector.broadcast %34 : vector<1x128xf32> to vector<8x128xf32>
    %36 = arith.mulf %33, %35 : vector<8x128xf32>
    %c0_18 = arith.constant 0 : index
    %c0_19 = arith.constant 0 : index
    %37 = vector.load %arg7[%c0_18, %c0_19] : memref<1x128xf32, #tpu.memory_space<vmem>>, vector<1x128xf32>
    %38 = vector.broadcast %37 : vector<1x128xf32> to vector<8x128xf32>
    %39 = arith.addf %36, %38 : vector<8x128xf32>
    %c0_20 = arith.constant 0 : index
    %c0_21 = arith.constant 0 : index
    %40 = vector.load %arg8[%c0_20, %c0_21] : memref<8x128xf32, #tpu.memory_space<vmem>>, vector<8x128xf32>
    tpu.vector_store %arg8[%c0_20, %c0_21], %39 {strides = array<i32>} : memref<8x128xf32, #tpu.memory_space<vmem>>, vector<8x128xf32>,
    return
  }
  func.func @transform_0(%arg0: i32) -> (i32, i32) {
    %c0_i32 = arith.constant 0 : i32
    %c0_i32_0 = arith.constant 0 : i32
    return %arg0, %c0_i32 : i32, i32
  }
  func.func @transform_1(%arg0: i32) -> (i32, i32) {
    %c0_i32 = arith.constant 0 : i32
    %c0_i32_0 = arith.constant 0 : i32
    %c0_i32_1 = arith.constant 0 : i32
    return %c0_i32, %c0_i32_0 : i32, i32
  }
  func.func @transform_2(%arg0: i32) -> (i32, i32) {
    %c0_i32 = arith.constant 0 : i32
    %c0_i32_0 = arith.constant 0 : i32
    %c0_i32_1 = arith.constant 0 : i32
    return %c0_i32, %c0_i32_0 : i32, i32
  }
  func.func @transform_3(%arg0: i32) -> (i32, i32) {
    %c0_i32 = arith.constant 0 : i32
    %c0_i32_0 = arith.constant 0 : i32
    %c0_i32_1 = arith.constant 0 : i32
    return %c0_i32, %c0_i32_0 : i32, i32
  }
  func.func @transform_4(%arg0: i32) -> (i32, i32) {
    %c0_i32 = arith.constant 0 : i32
    %c0_i32_0 = arith.constant 0 : i32
    %c0_i32_1 = arith.constant 0 : i32
    return %c0_i32, %c0_i32_0 : i32, i32
  }
  func.func @transform_5(%arg0: i32) -> (i32, i32) {
    %c0_i32 = arith.constant 0 : i32
    %c0_i32_0 = arith.constant 0 : i32
    %c0_i32_1 = arith.constant 0 : i32
    return %c0_i32, %c0_i32_0 : i32, i32
  }
  func.func @transform_6(%arg0: i32) -> (i32, i32) {
    %c0_i32 = arith.constant 0 : i32
    %c0_i32_0 = arith.constant 0 : i32
    %c0_i32_1 = arith.constant 0 : i32
    return %c0_i32, %c0_i32_0 : i32, i32
  }
  func.func @transform_7(%arg0: i32) -> (i32, i32) {
    %c0_i32 = arith.constant 0 : i32
    %c0_i32_0 = arith.constant 0 : i32
    return %arg0, %c0_i32 : i32, i32
  }
}

</mosaic_0001>

<llo_original>
// kernel: tpu_custom_call.1
$region0: #{tpu_custom_call.1}
  #allocation0 [shape = 'u32[]', space=smem, size = 0x4, offset = 0x4, fixed_abs, tag = 'smem constant byte address 0x4 - core index']
  #allocation1 [shape = 'u32[144,128]{1,0:T(1,128)}', space=vmem, size = 0x12000, scoped, tag = 'internal scratch']
  %s0 = inlined_call_operand.hbm [shape: f32[16,128], index: 0, kind: input, shape index: {}]
  %s1 = inlined_call_operand.hbm [shape: f32[128,256], index: 1, kind: input, shape index: {}]
  %s2 = inlined_call_operand.vmem [shape: f32[1,256], index: 2, kind: input, shape index: {}]
  %s3 = inlined_call_operand.hbm [shape: f32[128,128], index: 3, kind: input, shape index: {}]
  %s4 = inlined_call_operand.vmem [shape: f32[1,128], index: 4, kind: input, shape index: {}]
  %s5 = inlined_call_operand.vmem [shape: f32[1,128], index: 5, kind: input, shape index: {}]
  %s6 = inlined_call_operand.vmem [shape: f32[1,128], index: 6, kind: input, shape index: {}]
  %s7 = inlined_call_operand.hbm [shape: f32[16,128], index: 7, kind: output, shape index: {}]
  %s8 = sld [smem:[#allocation0]]
  $region73: #{tpu_custom_call.1} parent=0
    _
  %s10 = ssub.s32 1, %s8
  %s11 = scalar_select 0, %s10, %s8
  $region1: #{tpu_custom_call.1} parent=0
    #allocation2 [shape = 'u8[8192]{0}', space=vmem, size = 0x2000, scoped, tag = 'input window, operand 0']
    #allocation3 [shape = 's32[2]{0}', space=sflag, size = 0x8, scoped, tag = 'scoped memory for tpu_custom_call.1']
    #allocation4 [shape = 's32[2]{0}', space=sflag, size = 0x8, scoped, tag = 'scoped memory for tpu_custom_call.1']
    #allocation5 [shape = 'u8[131072]{0}', space=vmem, size = 0x20000, scoped, tag = 'input window, operand 1, single buffered']
    #allocation6 [shape = 's32[1]{0}', space=sflag, size = 0x4, scoped, tag = 'scoped memory for tpu_custom_call.1']
    #allocation7 [shape = 'u8[65536]{0}', space=vmem, size = 0x10000, scoped, tag = 'input window, operand 3, single buffered']
    #allocation8 [shape = 'u8[8192]{0}', space=vmem, size = 0x2000, scoped, tag = 'output window, operand 0']
    %12 = vsyncpa [#allocation3], 0
    %s13 = scalar_lea.sflag [#allocation3], 1
    %14 = vsyncpa %s13, 0
    %15 = vsyncpa [#allocation6], 0
    %16 = vsyncpa [#allocation4], 0
    %s17 = scalar_lea.sflag [#allocation4], 1
    %18 = vsyncpa %s17, 0
    loop: start=0, step=1, limit=4
    $region2: #{tpu_custom_call.1} parent=1 // loop_pre_header
      _
    $region3: #{tpu_custom_call.1} parent=1 // loop_header
      %s20 = sphi 0, %s24
      %p21 = scmp.ge.s32.totalorder %s20, 4
      %s30 = sphi 0, %s32
      %s33 = sphi 0, %s30
      %s34 = sphi 0, %s33
      %s50 = sphi 0, %s34
      %s54 = sphi 0, %s54
      %s56 = sphi 0, %s54
      %s57 = sphi 0, %s56
      %s71 = sphi 0, %s57
      %s75 = sphi 0, %s75
      %s77 = sphi 0, %s75
      %s78 = sphi 0, %s77
      %s92 = sphi 0, %s78
      %s96 = sphi 0, %s96
      %s98 = sphi 0, %s96
      %s99 = sphi 0, %s98
      %s113 = sphi 0, %s99
      %s117 = sphi 0, %s117
      %s119 = sphi 0, %s117
      %s120 = sphi 0, %s119
      %s134 = sphi 0, %s120
      %s138 = sphi 0, %s138
      %s140 = sphi 0, %s138
      %s141 = sphi 0, %s140
      %s155 = sphi 0, %s141
      %s159 = sphi 0, %s159
      %s161 = sphi 0, %s159
      %s162 = sphi 0, %s161
      %s176 = sphi 0, %s162
      %s182 = sphi 0, %s184
      %s185 = sphi 0, %s182
      %s186 = sphi 0, %s185
      %s202 = sphi 0, %s186
    $region4: #{tpu_custom_call.1} parent=1 // loop_header_branch
      %23 = sbr.rel (%p21) target = $region8
    $region5: #{tpu_custom_call.1} parent=1 // loop_body
      %s25 = ssub.s32 %s20, 1
      %s26 = ssub.s32 %s20, 2
      %s27 = sadd.s32 %s20, 1
      %s28 = ssub.s32 %s20, %s27
      %p29 = scmp.eq.s32.totalorder %s28, 0
      %s31 = sadd.s32 %s30, 1
      %s32 = scalar_select %p29, %s30, %s31
      %p35 = pneg %p29
      %p36 = scmp.eq.s32.totalorder %s20, 1
      %p37 = por %p35, %p36
      %p38 = scmp.ne.s32.totalorder %s30, %s33
      %p39 = scmp.eq.s32.totalorder %s20, 0
      %p40 = por %p38, %p39
      %p41 = scmp.ne.s32.totalorder %s30, %s33
      %p42 = scmp.eq.s32.totalorder %s25, 1
      %p43 = por %p41, %p42
      %p44 = scmp.ne.s32.totalorder %s33, %s34
      %p45 = scmp.eq.s32.totalorder %s25, 0
      %p46 = por %p44, %p45
      %p47 = scmp.ne.s32.totalorder %s33, %s34
      %p48 = scmp.eq.s32.totalorder %s26, 1
      %p49 = por %p47, %p48
      %p51 = scmp.ne.s32.totalorder %s34, %s50
      %p52 = scmp.eq.s32.totalorder %s26, 0
      %p53 = por %p51, %p52
      %s55 = sadd.s32 %s54, 1
      %p58 = scmp.eq.s32.totalorder %s20, 1
      %p59 = scmp.ne.s32.totalorder %s54, %s56
      %p60 = scmp.eq.s32.totalorder %s20, 0
      %p61 = por %p59, %p60
      %p62 = scmp.ne.s32.totalorder %s54, %s56
      %p63 = scmp.eq.s32.totalorder %s25, 1
      %p64 = por %p62, %p63
      %p65 = scmp.ne.s32.totalorder %s56, %s57
      %p66 = scmp.eq.s32.totalorder %s25, 0
      %p67 = por %p65, %p66
      %p68 = scmp.ne.s32.totalorder %s56, %s57
      %p69 = scmp.eq.s32.totalorder %s26, 1
      %p70 = por %p68, %p69
      %p72 = scmp.ne.s32.totalorder %s57, %s71
      %p73 = scmp.eq.s32.totalorder %s26, 0
      %p74 = por %p72, %p73
      %s76 = sadd.s32 %s75, 1
      %p79 = scmp.eq.s32.totalorder %s20, 1
      %p80 = scmp.ne.s32.totalorder %s75, %s77
      %p81 = scmp.eq.s32.totalorder %s20, 0
      %p82 = por %p80, %p81
      %p83 = scmp.ne.s32.totalorder %s75, %s77
      %p84 = scmp.eq.s32.totalorder %s25, 1
      %p85 = por %p83, %p84
      %p86 = scmp.ne.s32.totalorder %s77, %s78
      %p87 = scmp.eq.s32.totalorder %s25, 0
      %p88 = por %p86, %p87
      %p89 = scmp.ne.s32.totalorder %s77, %s78
      %p90 = scmp.eq.s32.totalorder %s26, 1
      %p91 = por %p89, %p90
      %p93 = scmp.ne.s32.totalorder %s78, %s92
      %p94 = scmp.eq.s32.totalorder %s26, 0
      %p95 = por %p93, %p94
      %s97 = sadd.s32 %s96, 1
      %p100 = scmp.eq.s32.totalorder %s20, 1
      %p101 = scmp.ne.s32.totalorder %s96, %s98
      %p102 = scmp.eq.s32.totalorder %s20, 0
      %p103 = por %p101, %p102
      %p104 = scmp.ne.s32.totalorder %s96, %s98
      %p105 = scmp.eq.s32.totalorder %s25, 1
      %p106 = por %p104, %p105
      %p107 = scmp.ne.s32.totalorder %s98, %s99
      %p108 = scmp.eq.s32.totalorder %s25, 0
      %p109 = por %p107, %p108
      %p110 = scmp.ne.s32.totalorder %s98, %s99
      %p111 = scmp.eq.s32.totalorder %s26, 1
      %p112 = por %p110, %p111
      %p114 = scmp.ne.s32.totalorder %s99, %s113
      %p115 = scmp.eq.s32.totalorder %s26, 0
      %p116 = por %p114, %p115
      %s118 = sadd.s32 %s117, 1
      %p121 = scmp.eq.s32.totalorder %s20, 1
      %p122 = scmp.ne.s32.totalorder %s117, %s119
      %p123 = scmp.eq.s32.totalorder %s20, 0
      %p124 = por %p122, %p123
      %p125 = scmp.ne.s32.totalorder %s117, %s119
      %p126 = scmp.eq.s32.totalorder %s25, 1
      %p127 = por %p125, %p126
      %p128 = scmp.ne.s32.totalorder %s119, %s120
      %p129 = scmp.eq.s32.totalorder %s25, 0
      %p130 = por %p128, %p129
      %p131 = scmp.ne.s32.totalorder %s119, %s120
      %p132 = scmp.eq.s32.totalorder %s26, 1
      %p133 = por %p131, %p132
      %p135 = scmp.ne.s32.totalorder %s120, %s134
      %p136 = scmp.eq.s32.totalorder %s26, 0
      %p137 = por %p135, %p136
      %s139 = sadd.s32 %s138, 1
      %p142 = scmp.eq.s32.totalorder %s20, 1
      %p143 = scmp.ne.s32.totalorder %s138, %s140
      %p144 = scmp.eq.s32.totalorder %s20, 0
      %p145 = por %p143, %p144
      %p146 = scmp.ne.s32.totalorder %s138, %s140
      %p147 = scmp.eq.s32.totalorder %s25, 1
      %p148 = por %p146, %p147
      %p149 = scmp.ne.s32.totalorder %s140, %s141
      %p150 = scmp.eq.s32.totalorder %s25, 0
      %p151 = por %p149, %p150
      %p152 = scmp.ne.s32.totalorder %s140, %s141
      %p153 = scmp.eq.s32.totalorder %s26, 1
      %p154 = por %p152, %p153
      %p156 = scmp.ne.s32.totalorder %s141, %s155
      %p157 = scmp.eq.s32.totalorder %s26, 0
      %p158 = por %p156, %p157
      %s160 = sadd.s32 %s159, 1
      %p163 = scmp.eq.s32.totalorder %s20, 1
      %p164 = scmp.ne.s32.totalorder %s159, %s161
      %p165 = scmp.eq.s32.totalorder %s20, 0
      %p166 = por %p164, %p165
      %p167 = scmp.ne.s32.totalorder %s159, %s161
      %p168 = scmp.eq.s32.totalorder %s25, 1
      %p169 = por %p167, %p168
      %p170 = scmp.ne.s32.totalorder %s161, %s162
      %p171 = scmp.eq.s32.totalorder %s25, 0
      %p172 = por %p170, %p171
      %p173 = scmp.ne.s32.totalorder %s161, %s162
      %p174 = scmp.eq.s32.totalorder %s26, 1
      %p175 = por %p173, %p174
      %p177 = scmp.ne.s32.totalorder %s162, %s176
      %p178 = scmp.eq.s32.totalorder %s26, 0
      %p179 = por %p177, %p178
      %s180 = ssub.s32 %s20, %s27
      %p181 = scmp.eq.s32.totalorder %s180, 0
      %s183 = sadd.s32 %s182, 1
      %s184 = scalar_select %p181, %s182, %s183
      %p187 = pneg %p181
      %p188 = scmp.eq.s32.totalorder %s20, 1
      %p189 = por %p187, %p188
      %p190 = scmp.ne.s32.totalorder %s182, %s185
      %p191 = scmp.eq.s32.totalorder %s20, 0
      %p192 = por %p190, %p191
      %p193 = scmp.ne.s32.totalorder %s182, %s185
      %p194 = scmp.eq.s32.totalorder %s25, 1
      %p195 = por %p193, %p194
      %p196 = scmp.ne.s32.totalorder %s185, %s186
      %p197 = scmp.eq.s32.totalorder %s25, 0
      %p198 = por %p196, %p197
      %p199 = scmp.ne.s32.totalorder %s185, %s186
      %p200 = scmp.eq.s32.totalorder %s26, 1
      %p201 = por %p199, %p200
      %p203 = scmp.ne.s32.totalorder %s186, %s202
      %p204 = scmp.eq.s32.totalorder %s26, 0
      %p205 = por %p203, %p204
      %p206 = scmp.le.s32.totalorder 1, %s20
      %p207 = scmp.lt.s32.totalorder %s20, 3
      %p208 = pnand %p206, %p207
      %p209 = pneg %p208
      // Predicated region
      $region9: #{tpu_custom_call.1} parent=5 // pred_check
        _
      $region10: #{tpu_custom_call.1} parent=5 // pred_check_branch
        %211 = sbr.rel (%p208) target = $region12
      $region11: #{tpu_custom_call.1} parent=5 // pred_region
        %s212 = ssub.s32 %s20, 1
        // Predicated region
        $region13: #{tpu_custom_call.1} parent=11 // pred_check
          %p213 = pneg %p67
        $region14: #{tpu_custom_call.1} parent=11 // pred_check_branch
          %215 = sbr.rel (%p213) target = $region16
        $region15: #{tpu_custom_call.1} parent=11 // pred_region
          %s217 = ssub.s32 4096, 4096
          %218 = vsyncadd [#allocation6], %s217
          %s219 = sshll.u32 [#allocation5], 4
          %s220 = int_to_ptr.vmem [resolvable:$true] %s219
          %225 = dma.hbm_to_vmem [thread:$0]  %s1, 4096, %s220, [#allocation6], 256, 256, 16
        $region16: #{tpu_custom_call.1} parent=11 // pred_fallthru
          _
        // Predicated region
        $region17: #{tpu_custom_call.1} parent=11 // pred_check
          %p226 = pneg %p88
        $region18: #{tpu_custom_call.1} parent=11 // pred_check_branch
          %228 = sbr.rel (%p226) target = $region20
        $region19: #{tpu_custom_call.1} parent=11 // pred_region
          _
        $region20: #{tpu_custom_call.1} parent=11 // pred_fallthru
          _
        // Predicated region
        $region21: #{tpu_custom_call.1} parent=11 // pred_check
          %p229 = pneg %p109
        $region22: #{tpu_custom_call.1} parent=11 // pred_check_branch
          %231 = sbr.rel (%p229) target = $region24
        $region23: #{tpu_custom_call.1} parent=11 // pred_region
          %s233 = ssub.s32 2048, 2048
          %234 = vsyncadd [#allocation6], %s233
          %s235 = sshll.u32 [#allocation7], 4
          %s236 = int_to_ptr.vmem [resolvable:$true] %s235
          %241 = dma.hbm_to_vmem [thread:$0]  %s3, 2048, %s236, [#allocation6], 128, 128, 8
        $region24: #{tpu_custom_call.1} parent=11 // pred_fallthru
          _
        // Predicated region
        $region25: #{tpu_custom_call.1} parent=11 // pred_check
          %p242 = pneg %p130
        $region26: #{tpu_custom_call.1} parent=11 // pred_check_branch
          %244 = sbr.rel (%p242) target = $region28
        $region27: #{tpu_custom_call.1} parent=11 // pred_region
          _
        $region28: #{tpu_custom_call.1} parent=11 // pred_fallthru
          _
        // Predicated region
        $region29: #{tpu_custom_call.1} parent=11 // pred_check
          %p245 = pneg %p151
        $region30: #{tpu_custom_call.1} parent=11 // pred_check_branch
          %247 = sbr.rel (%p245) target = $region32
        $region31: #{tpu_custom_call.1} parent=11 // pred_region
          _
        $region32: #{tpu_custom_call.1} parent=11 // pred_fallthru
          _
        // Predicated region
        $region33: #{tpu_custom_call.1} parent=11 // pred_check
          %p248 = pneg %p172
        $region34: #{tpu_custom_call.1} parent=11 // pred_check_branch
          %250 = sbr.rel (%p248) target = $region36
        $region35: #{tpu_custom_call.1} parent=11 // pred_region
          _
        $region36: #{tpu_custom_call.1} parent=11 // pred_fallthru
          _
      $region12: #{tpu_custom_call.1} parent=5 // pred_fallthru
        _
      %p251 = scmp.lt.s32.totalorder %s20, 2
      // Predicated region
      $region37: #{tpu_custom_call.1} parent=5 // pred_check
        %p252 = pneg %p251
      $region38: #{tpu_custom_call.1} parent=5 // pred_check_branch
        %254 = sbr.rel (%p252) target = $region40
      $region39: #{tpu_custom_call.1} parent=5 // pred_region
        // Predicated region
        $region41: #{tpu_custom_call.1} parent=39 // pred_check
          %p255 = pneg %p40
        $region42: #{tpu_custom_call.1} parent=39 // pred_check_branch
          %257 = sbr.rel (%p255) target = $region44
        $region43: #{tpu_custom_call.1} parent=39 // pred_region
          %s258 = sand.u32 %s30, 1
          %s259 = scalar_lea.sflag [#allocation3], %s258
          %s260 = sand.u32 %s30, 1
          %s261 = smul.addr %s260, 8
          %s262 = scalar_lea.vmem [#allocation2], %s261
          %s264 = ssub.s32 128, 128
          %265 = vsyncadd %s259, %s264
          %s266 = smul.addr %s20, 128
          %s267 = scalar_lea.hbm %s0, %s266
          %s269 = sshll.u32 %s262, 4
          %s270 = int_to_ptr.vmem [resolvable:$true] %s269
          %272 = dma.hbm_to_vmem [thread:$0]  %s267, 128, %s270, %s259
        $region44: #{tpu_custom_call.1} parent=39 // pred_fallthru
          _
      $region40: #{tpu_custom_call.1} parent=5 // pred_fallthru
        _
      %p273 = scmp.le.s32.totalorder 1, %s20
      %p274 = scmp.lt.s32.totalorder %s20, 3
      %p275 = pnand %p273, %p274
      %p276 = pneg %p275
      // Predicated region
      $region45: #{tpu_custom_call.1} parent=5 // pred_check
        _
      $region46: #{tpu_custom_call.1} parent=5 // pred_check_branch
        %278 = sbr.rel (%p275) target = $region48
      $region47: #{tpu_custom_call.1} parent=5 // pred_region
        %s279 = ssub.s32 %s20, 1
        %s280 = sand.u32 %s33, 1
        %s281 = scalar_lea.sflag [#allocation3], %s280
        %s282 = sand.u32 %s33, 1
        %s283 = smul.addr %s282, 8
        %s284 = scalar_lea.vmem [#allocation2], %s283
        // Predicated region
        $region49: #{tpu_custom_call.1} parent=47 // pred_check
          %p285 = pneg %p46
        $region50: #{tpu_custom_call.1} parent=47 // pred_check_branch
          %287 = sbr.rel (%p285) target = $region52
        $region51: #{tpu_custom_call.1} parent=47 // pred_region
          %288 = dma.done %s281, 128
        $region52: #{tpu_custom_call.1} parent=47 // pred_fallthru
          _
        // Predicated region
        $region53: #{tpu_custom_call.1} parent=47 // pred_check
          %p289 = pneg %p67
        $region54: #{tpu_custom_call.1} parent=47 // pred_check_branch
          %291 = sbr.rel (%p289) target = $region56
        $region55: #{tpu_custom_call.1} parent=47 // pred_region
          %292 = dma.done [#allocation6], 4096
        $region56: #{tpu_custom_call.1} parent=47 // pred_fallthru
          _
        // Predicated region
        $region57: #{tpu_custom_call.1} parent=47 // pred_check
          %p293 = pneg %p109
        $region58: #{tpu_custom_call.1} parent=47 // pred_check_branch
          %295 = sbr.rel (%p293) target = $region60
        $region59: #{tpu_custom_call.1} parent=47 // pred_region
          %296 = dma.done [#allocation6], 2048
        $region60: #{tpu_custom_call.1} parent=47 // pred_fallthru
          _
        %s297 = sand.u32 %s33, 1
        %s298 = scalar_lea.sflag [#allocation3], %s297
        %s299 = sand.u32 %s33, 1
        %s300 = smul.addr %s299, 8
        %s301 = scalar_lea.vmem [#allocation2], %s300
        %p302 = pneg %p46
        %p303 = pneg %p43
        %p304 = pneg %p67
        %p305 = pneg %p64
        %p306 = pneg %p88
        %p307 = pneg %p85
        %p308 = pneg %p109
        %p309 = pneg %p106
        %p310 = pneg %p130
        %p311 = pneg %p127
        %p312 = pneg %p151
        %p313 = pneg %p148
        %p314 = pneg %p172
        %p315 = pneg %p169
        %p316 = pneg %p198
        %p317 = pneg %p195
        %s318 = sand.u32 %s185, 1
        %s319 = scalar_lea.sflag [#allocation4], %s318
        %s320 = sand.u32 %s185, 1
        %s321 = smul.addr %s320, 8
        %s322 = scalar_lea.vmem [#allocation8], %s321
        %v323 = vld [vmem:[%s284] sm:$0xff]
        %v324 = vld [vmem:[#allocation5] sm:$0xff]
        %v325 = vld [vmem:[#allocation5 + $0x8] sm:$0xff]
        %v326 = vld [vmem:[#allocation5 + $0x10] sm:$0xff]
        %v327 = vld [vmem:[#allocation5 + $0x18] sm:$0xff]
        %v328 = vld [vmem:[#allocation5 + $0x20] sm:$0xff]
        %v329 = vld [vmem:[#allocation5 + $0x28] sm:$0xff]
        %v330 = vld [vmem:[#allocation5 + $0x30] sm:$0xff]
        %v331 = vld [vmem:[#allocation5 + $0x38] sm:$0xff]
        %v332 = vld [vmem:[#allocation5 + $0x40] sm:$0xff]
        %v333 = vld [vmem:[#allocation5 + $0x48] sm:$0xff]
        %v334 = vld [vmem:[#allocation5 + $0x50] sm:$0xff]
        %v335 = vld [vmem:[#allocation5 + $0x58] sm:$0xff]
        %v336 = vld [vmem:[#allocation5 + $0x60] sm:$0xff]
        %v337 = vld [vmem:[#allocation5 + $0x68] sm:$0xff]
        %v338 = vld [vmem:[#allocation5 + $0x70] sm:$0xff]
        %v339 = vld [vmem:[#allocation5 + $0x78] sm:$0xff]
        %v340 = vld [vmem:[#allocation5 + $0x80] sm:$0xff]
        %v341 = vld [vmem:[#allocation5 + $0x88] sm:$0xff]
        %v342 = vld [vmem:[#allocation5 + $0x90] sm:$0xff]
        %v343 = vld [vmem:[#allocation5 + $0x98] sm:$0xff]
        %v344 = vld [vmem:[#allocation5 + $0xa0] sm:$0xff]
        %v345 = vld [vmem:[#allocation5 + $0xa8] sm:$0xff]
        %v346 = vld [vmem:[#allocation5 + $0xb0] sm:$0xff]
        %v347 = vld [vmem:[#allocation5 + $0xb8] sm:$0xff]
        %v348 = vld [vmem:[#allocation5 + $0xc0] sm:$0xff]
        %v349 = vld [vmem:[#allocation5 + $0xc8] sm:$0xff]
        %v350 = vld [vmem:[#allocation5 + $0xd0] sm:$0xff]
        %v351 = vld [vmem:[#allocation5 + $0xd8] sm:$0xff]
        %v352 = vld [vmem:[#allocation5 + $0xe0] sm:$0xff]
        %v353 = vld [vmem:[#allocation5 + $0xe8] sm:$0xff]
        %v354 = vld [vmem:[#allocation5 + $0xf0] sm:$0xff]
        %v355 = vld [vmem:[#allocation5 + $0xf8] sm:$0xff]
        %v356 = vld [vmem:[%s2] sm:$0x3]
        %v358 = vlaneseq
        %v359 = vshrl.u32 %v358, 7
        %v360 = vsub.s32 0, %v359
        %v361 = vrot.slane %v356, %v360
        %v362 = vlaneseq
        %v363 = vshrl.u32 %v362, 7
        %v364 = vsub.s32 1, %v363
        %v365 = vrot.slane %v356, %v364
        %368 = vmatprep.subr.mxu0 %v325
        %369 = vmatpush1.msra.mxu0 %v324
        %370 = vmatprep.subr.mxu0 %v327
        %371 = vmatpush1.msra.mxu0 %v326
        %372 = vmatprep.subr.mxu0 %v329
        %373 = vmatpush1.msra.mxu0 %v328
        %374 = vmatprep.subr.mxu0 %v331
        %375 = vmatpush1.msra.mxu0 %v330
        %376 = vmatprep.subr.mxu0 %v333
        %377 = vmatpush1.msra.mxu0 %v332
        %378 = vmatprep.subr.mxu0 %v335
        %379 = vmatpush1.msra.mxu0 %v334
        %380 = vmatprep.subr.mxu0 %v337
        %381 = vmatpush1.msra.mxu0 %v336
        %382 = vmatprep.subr.mxu0 %v339
        %383 = vmatpush1.msra.mxu0 %v338
        %384 = vmatprep.subr.mxu0 %v341
        %385 = vmatpush1.msra.mxu0 %v340
        %386 = vmatprep.subr.mxu0 %v343
        %387 = vmatpush1.msra.mxu0 %v342
        %388 = vmatprep.subr.mxu0 %v345
        %389 = vmatpush1.msra.mxu0 %v344
        %390 = vmatprep.subr.mxu0 %v347
        %391 = vmatpush1.msra.mxu0 %v346
        %392 = vmatprep.subr.mxu0 %v349
        %393 = vmatpush1.msra.mxu0 %v348
        %394 = vmatprep.subr.mxu0 %v351
        %395 = vmatpush1.msra.mxu0 %v350
        %396 = vmatprep.subr.mxu0 %v353
        %397 = vmatpush1.msra.mxu0 %v352
        %398 = vmatprep.subr.mxu0 %v355
        %399 = vmatpush1.msra.mxu0 %v354
        %400 = vmatprep.subr.mxu0 0.0
        %401 = vmatpush1.msra.mxu0 0.0
        %402 = vmatprep.subr.mxu0 0.0
        %403 = vmatpush1.msra.mxu0 0.0
        %404 = vmatprep.subr.mxu0 0.0
        %405 = vmatpush1.msra.mxu0 0.0
        %406 = vmatprep.subr.mxu0 0.0
        %407 = vmatpush1.msra.mxu0 0.0
        %408 = vmatprep.subr.mxu0 0.0
        %409 = vmatpush1.msra.mxu0 0.0
        %410 = vmatprep.subr.mxu0 0.0
        %411 = vmatpush1.msra.mxu0 0.0
        %412 = vmatprep.subr.mxu0 0.0
        %413 = vmatpush1.msra.mxu0 0.0
        %414 = vmatprep.subr.mxu0 0.0
        %415 = vmatpush1.msra.mxu0 0.0
        %416 = vmatprep.subr.mxu0 0.0
        %417 = vmatpush1.msra.mxu0 0.0
        %418 = vmatprep.subr.mxu0 0.0
        %419 = vmatpush1.msra.mxu0 0.0
        %420 = vmatprep.subr.mxu0 0.0
        %421 = vmatpush1.msra.mxu0 0.0
        %422 = vmatprep.subr.mxu0 0.0
        %423 = vmatpush1.msra.mxu0 0.0
        %424 = vmatprep.subr.mxu0 0.0
        %425 = vmatpush1.msra.mxu0 0.0
        %426 = vmatprep.subr.mxu0 0.0
        %427 = vmatpush1.msra.mxu0 0.0
        %428 = vmatprep.subr.mxu0 0.0
        %429 = vmatpush1.msra.mxu0 0.0
        %430 = vmatprep.subr.mxu0 0.0
        %431 = vmatpush1.msra.mxu0 0.0
        %432 = vmatprep.mubr.f32.mxu0 0.0
        %433 = vmatmul.mubr.f32.gmra.mrb[0].mxu0 %v323
        %v434 = vpop.f32.mrb[0].mxu0
        %v435 = vadd.f32 %v361, %v434
        %v436 = vpop.f32.mrb[0].mxu0
        %v437 = vadd.f32 %v365, %v436
        %438 = vdwg.mxu0
        %v439 = vmax.f32 %v435, 0.0
        %v440 = vld [vmem:[#allocation7] sm:$0xff]
        %v441 = vld [vmem:[#allocation7 + $0x8] sm:$0xff]
        %v442 = vld [vmem:[#allocation7 + $0x10] sm:$0xff]
        %v443 = vld [vmem:[#allocation7 + $0x18] sm:$0xff]
        %v444 = vld [vmem:[#allocation7 + $0x20] sm:$0xff]
        %v445 = vld [vmem:[#allocation7 + $0x28] sm:$0xff]
        %v446 = vld [vmem:[#allocation7 + $0x30] sm:$0xff]
        %v447 = vld [vmem:[#allocation7 + $0x38] sm:$0xff]
        %v448 = vld [vmem:[#allocation7 + $0x40] sm:$0xff]
        %v449 = vld [vmem:[#allocation7 + $0x48] sm:$0xff]
        %v450 = vld [vmem:[#allocation7 + $0x50] sm:$0xff]
        %v451 = vld [vmem:[#allocation7 + $0x58] sm:$0xff]
        %v452 = vld [vmem:[#allocation7 + $0x60] sm:$0xff]
        %v453 = vld [vmem:[#allocation7 + $0x68] sm:$0xff]
        %v454 = vld [vmem:[#allocation7 + $0x70] sm:$0xff]
        %v455 = vld [vmem:[#allocation7 + $0x78] sm:$0xff]
        %v456 = vld [vmem:[%s4] sm:$0x1]
        %v458 = vlaneseq
        %v459 = vshrl.u32 %v458, 7
        %v460 = vsub.s32 0, %v459
        %v461 = vrot.slane %v456, %v460
        %463 = vmatprep.subr.mxu0 0.0
        %464 = vmatpush1.msra.mxu0 %v440
        %465 = vmatprep.subr.mxu0 0.0
        %466 = vmatpush1.msra.mxu0 %v441
        %467 = vmatprep.subr.mxu0 0.0
        %468 = vmatpush1.msra.mxu0 %v442
        %469 = vmatprep.subr.mxu0 0.0
        %470 = vmatpush1.msra.mxu0 %v443
        %471 = vmatprep.subr.mxu0 0.0
        %472 = vmatpush1.msra.mxu0 %v444
        %473 = vmatprep.subr.mxu0 0.0
        %474 = vmatpush1.msra.mxu0 %v445
        %475 = vmatprep.subr.mxu0 0.0
        %476 = vmatpush1.msra.mxu0 %v446
        %477 = vmatprep.subr.mxu0 0.0
        %478 = vmatpush1.msra.mxu0 %v447
        %479 = vmatprep.subr.mxu0 0.0
        %480 = vmatpush1.msra.mxu0 %v448
        %481 = vmatprep.subr.mxu0 0.0
        %482 = vmatpush1.msra.mxu0 %v449
        %483 = vmatprep.subr.mxu0 0.0
        %484 = vmatpush1.msra.mxu0 %v450
        %485 = vmatprep.subr.mxu0 0.0
        %486 = vmatpush1.msra.mxu0 %v451
        %487 = vmatprep.subr.mxu0 0.0
        %488 = vmatpush1.msra.mxu0 %v452
        %489 = vmatprep.subr.mxu0 0.0
        %490 = vmatpush1.msra.mxu0 %v453
        %491 = vmatprep.subr.mxu0 0.0
        %492 = vmatpush1.msra.mxu0 %v454
        %493 = vmatprep.subr.mxu0 0.0
        %494 = vmatpush1.msra.mxu0 %v455
        %495 = vmatprep.subr.mxu0 0.0
        %496 = vmatpush1.msra.mxu0 0.0
        %497 = vmatprep.subr.mxu0 0.0
        %498 = vmatpush1.msra.mxu0 0.0
        %499 = vmatprep.subr.mxu0 0.0
        %500 = vmatpush1.msra.mxu0 0.0
        %501 = vmatprep.subr.mxu0 0.0
        %502 = vmatpush1.msra.mxu0 0.0
        %503 = vmatprep.subr.mxu0 0.0
        %504 = vmatpush1.msra.mxu0 0.0
        %505 = vmatprep.subr.mxu0 0.0
        %506 = vmatpush1.msra.mxu0 0.0
        %507 = vmatprep.subr.mxu0 0.0
        %508 = vmatpush1.msra.mxu0 0.0
        %509 = vmatprep.subr.mxu0 0.0
        %510 = vmatpush1.msra.mxu0 0.0
        %511 = vmatprep.subr.mxu0 0.0
        %512 = vmatpush1.msra.mxu0 0.0
        %513 = vmatprep.subr.mxu0 0.0
        %514 = vmatpush1.msra.mxu0 0.0
        %515 = vmatprep.subr.mxu0 0.0
        %516 = vmatpush1.msra.mxu0 0.0
        %517 = vmatprep.subr.mxu0 0.0
        %518 = vmatpush1.msra.mxu0 0.0
        %519 = vmatprep.subr.mxu0 0.0
        %520 = vmatpush1.msra.mxu0 0.0
        %521 = vmatprep.subr.mxu0 0.0
        %522 = vmatpush1.msra.mxu0 0.0
        %523 = vmatprep.subr.mxu0 0.0
        %524 = vmatpush1.msra.mxu0 0.0
        %525 = vmatprep.subr.mxu0 0.0
        %526 = vmatpush1.msra.mxu0 0.0
        %527 = vmatprep.mubr.f32.mxu0 0.0
        %528 = vmatmul.mubr.f32.gmra.mrb[0].mxu0 %v439
        %v529 = vpop.f32.mrb[0].mxu0
        %v530 = vadd.f32 %v461, %v529
        %v531 = vpop.f32.mrb[0].mxu0
        %532 = vdwg.mxu0
        %v533 = vadd.f32 %v530, %v437
        %534 = vadd.xlane.f32.xlu0 %v533
        %v535 = vpop.xlane.xlu0 %534
        %v536 = vmul.f32 %v535, 0.0625
        %v537 = vmul.f32 %v533, %v533
        %538 = vadd.xlane.f32.xlu0 %v537
        %v539 = vpop.xlane.xlu0 %538
        %v540 = vmul.f32 %v539, 0.0625
        %v541 = vmul.f32 %v536, %v536
        %v542 = vsub.f32 %v540, %v541
        %v543 = vsub.f32 %v533, %v536
        %v544 = vadd.f32 %v542, 1e-05
        %v545 = vrsqrt.pop %v544
        %v546 = vmul.f32 %v543, %v545
        %v547 = vld [vmem:[%s5] sm:$0x1]
        %v549 = vlaneseq
        %v550 = vshrl.u32 %v549, 7
        %v551 = vsub.s32 0, %v550
        %v552 = vrot.slane %v547, %v551
        %v554 = vmul.f32 %v546, %v552
        %v555 = vld [vmem:[%s6] sm:$0x1]
        %v557 = vlaneseq
        %v558 = vshrl.u32 %v557, 7
        %v559 = vsub.s32 0, %v558
        %v560 = vrot.slane %v555, %v559
        %v562 = vadd.f32 %v554, %v560
        %563 = vst [vmem:[%s322] sm:$0xff] %v562
        %s564 = sand.u32 %s185, 1
        %s565 = scalar_lea.sflag [#allocation4], %s564
        %s566 = sand.u32 %s185, 1
        %s567 = smul.addr %s566, 8
        %s568 = scalar_lea.vmem [#allocation8], %s567
        // Predicated region
        $region61: #{tpu_custom_call.1} parent=47 // pred_check
          %p569 = pneg %p195
        $region62: #{tpu_custom_call.1} parent=47 // pred_check_branch
          %571 = sbr.rel (%p569) target = $region64
        $region63: #{tpu_custom_call.1} parent=47 // pred_region
          %s573 = ssub.s32 128, 128
          %574 = vsyncadd %s565, %s573
          %s575 = smul.addr %s25, 128
          %s576 = scalar_lea.hbm %s7, %s575
          %s578 = sshll.u32 %s568, 4
          %s579 = int_to_ptr.vmem [resolvable:$true] %s578
          %581 = dma.vmem_to_hbm [thread:$0]  %s579, 128, %s576, %s565
        $region64: #{tpu_custom_call.1} parent=47 // pred_fallthru
          _
      $region48: #{tpu_custom_call.1} parent=5 // pred_fallthru
        _
      %p582 = scmp.le.s32.totalorder 2, %s20
      // Predicated region
      $region65: #{tpu_custom_call.1} parent=5 // pred_check
        %p583 = pneg %p582
      $region66: #{tpu_custom_call.1} parent=5 // pred_check_branch
        %585 = sbr.rel (%p583) target = $region68
      $region67: #{tpu_custom_call.1} parent=5 // pred_region
        %s586 = ssub.s32 %s20, 2
        // Predicated region
        $region69: #{tpu_custom_call.1} parent=67 // pred_check
          %p587 = pneg %p201
        $region70: #{tpu_custom_call.1} parent=67 // pred_check_branch
          %589 = sbr.rel (%p587) target = $region72
        $region71: #{tpu_custom_call.1} parent=67 // pred_region
          %s590 = sand.u32 %s186, 1
          %s591 = scalar_lea.sflag [#allocation4], %s590
          %s592 = sand.u32 %s186, 1
          %s593 = smul.addr %s592, 8
          %s594 = scalar_lea.vmem [#allocation8], %s593
          %595 = dma.done %s591, 128
        $region72: #{tpu_custom_call.1} parent=67 // pred_fallthru
          _
      $region68: #{tpu_custom_call.1} parent=5 // pred_fallthru
        _
    $region6: #{tpu_custom_call.1} parent=1 // loop_footer
      %s24 = sadd.s32 1, %s20
    $region7: #{tpu_custom_call.1} parent=1 // loop_footer_branch
      %19 = sbr.rel target = $region3
    $region8: #{tpu_custom_call.1} parent=1 // loop_exit
      _
    %596 = vsyncpa [#allocation3], 1
    %s597 = scalar_lea.sflag [#allocation3], 1
    %598 = vsyncpa %s597, 1
    %599 = vsyncpa [#allocation6], 1
    %600 = vsyncpa [#allocation4], 1
    %s601 = scalar_lea.sflag [#allocation4], 1
    %602 = vsyncpa %s601, 1

</llo_original>
